<compile_context>
chip_gen: v7x
topology: tpu7x:2x2x1
jax: 0.10.0
libtpu: 0.0.40
codegen_flags: <defaults>
</compile_context>

<pallas_src>
import math

import jax
import jax.numpy as jnp
from jax.experimental import pallas as pl
from jax.experimental.pallas import tpu as pltpu


def _layer_scale_kernel(x_ref, g_ref, o_ref):
    # (TM, dim) * (1, dim) broadcast on the VPU; gamma tile is VMEM-resident.
    o_ref[...] = (x_ref[...] * g_ref[...]).astype(o_ref.dtype)


def layer_scale_pallas(x, gamma, *, tm=512):
    """LayerScale forward: x * gamma.

    x: (..., dim) array; gamma: (dim,) per-feature scale.
    """
    orig_shape = x.shape
    dim = orig_shape[-1]
    M = math.prod(orig_shape[:-1]) if len(orig_shape) > 1 else 1

    x2d = x.reshape(M, dim)
    g2d = gamma.reshape(1, dim).astype(x.dtype)

    # Tile the M (token) axis; keep the tile a multiple of 8 sublanes unless it
    # covers the whole array. tm=512 keeps the per-tile VMEM footprint small
    # enough for v7x's 64 MiB while staying near the HBM roofline on v6e.
    TM = min(tm, M)
    if TM != M:
        TM = max(8, (TM // 8) * 8)
    grid = (pl.cdiv(M, TM),)

    itemsize = jnp.dtype(x.dtype).itemsize
    cost = pl.CostEstimate(
        flops=M * dim,
        transcendentals=0,
        bytes_accessed=(2 * M * dim + dim) * itemsize,
    )

    out2d = pl.pallas_call(
        _layer_scale_kernel,
        out_shape=jax.ShapeDtypeStruct((M, dim), x.dtype),
        grid_spec=pl.GridSpec(
            grid=grid,
            in_specs=[
                pl.BlockSpec((TM, dim), lambda i: (i, 0)),   # x tile, pipelined
                pl.BlockSpec((1, dim), lambda i: (0, 0)),    # gamma, resident
            ],
            out_specs=pl.BlockSpec((TM, dim), lambda i: (i, 0)),
        ),
        compiler_params=pltpu.CompilerParams(
            dimension_semantics=("parallel",),  # independent M tiles -> v7x dual-TC
        ),
        cost_estimate=cost,
    )(x2d, g2d)
    return out2d.reshape(orig_shape)


def layer_scale_reference(x, gamma):
    return x * gamma


if __name__ == "__main__":
    # Module config: LayerScale(dim=128, init_values=1e-5)
    # Small, lane-dense test shapes: x is (B, T, dim) = (2, 8, 128).
    B, T, dim = 2, 8, 128
    init_values = 1e-5

    key = jax.random.PRNGKey(0)
    kx, kg = jax.random.split(key, 2)

    x = jax.random.normal(kx, (B, T, dim), dtype=jnp.float32)
    # gamma initialized as in the module (init_values * ones), perturbed a bit
    # to emulate a trained parameter so the check is non-trivial.
    gamma = init_values * jnp.ones((dim,), dtype=jnp.float32) \
        + 0.01 * jax.random.normal(kg, (dim,), dtype=jnp.float32)

    out = layer_scale_pallas(x, gamma)
    out = jax.block_until_ready(out)

    ref = layer_scale_reference(x, gamma)
    assert out.shape == (B, T, dim)
    assert jnp.allclose(out, ref, atol=1e-6, rtol=1e-6), "mismatch vs reference"

    print("KERNEL_OK")
</pallas_src>

<mosaic_0001>
module attributes {stable_mosaic.version = 11 : i64} {
  func.func @_layer_scale_kernel(%arg0: i32, %arg1: memref<16x128xf32, #tpu.memory_space<vmem>>, %arg2: memref<1x128xf32, #tpu.memory_space<vmem>>, %arg3: memref<16x128xf32, #tpu.memory_space<vmem>>) attributes {dimension_semantics = [#tpu.dimension_semantics<parallel>], iteration_bounds = array<i64: 1>, scalar_prefetch = 0 : i64, scratch_operands = 0 : i64, tpu.core_type = #tpu.core_type<tc>, window_params = [{transform_indices = @transform_0, window_bounds = array<i64: 16, 128>}, {pipeline_mode = #tpu.pipeline_mode<synchronous>, transform_indices = @transform_1, window_bounds = array<i64: 1, 128>}, {transform_indices = @transform_2, window_bounds = array<i64: 16, 128>}]} {
    %c0 = arith.constant 0 : index
    %c0_0 = arith.constant 0 : index
    %0 = vector.load %arg1[%c0, %c0_0] : memref<16x128xf32, #tpu.memory_space<vmem>>, vector<16x128xf32>
    %c0_1 = arith.constant 0 : index
    %c0_2 = arith.constant 0 : index
    %1 = vector.load %arg2[%c0_1, %c0_2] : memref<1x128xf32, #tpu.memory_space<vmem>>, vector<1x128xf32>
    %2 = vector.broadcast %1 : vector<1x128xf32> to vector<16x128xf32>
    %3 = arith.mulf %0, %2 : vector<16x128xf32>
    %c0_3 = arith.constant 0 : index
    %c0_4 = arith.constant 0 : index
    %4 = vector.load %arg3[%c0_3, %c0_4] : memref<16x128xf32, #tpu.memory_space<vmem>>, vector<16x128xf32>
    tpu.vector_store %arg3[%c0_3, %c0_4], %3 {strides = array<i32>} : memref<16x128xf32, #tpu.memory_space<vmem>>, vector<16x128xf32>,
    return
  }
  func.func @transform_0(%arg0: i32) -> (i32, i32) {
    %c0_i32 = arith.constant 0 : i32
    %c0_i32_0 = arith.constant 0 : i32
    return %arg0, %c0_i32 : i32, i32
  }
  func.func @transform_1(%arg0: i32) -> (i32, i32) {
    %c0_i32 = arith.constant 0 : i32
    %c0_i32_0 = arith.constant 0 : i32
    %c0_i32_1 = arith.constant 0 : i32
    return %c0_i32, %c0_i32_0 : i32, i32
  }
  func.func @transform_2(%arg0: i32) -> (i32, i32) {
    %c0_i32 = arith.constant 0 : i32
    %c0_i32_0 = arith.constant 0 : i32
    return %arg0, %c0_i32 : i32, i32
  }
}

</mosaic_0001>

<llo_original>
// kernel: tpu_custom_call.1
$region0: #{tpu_custom_call.1}
  #allocation0 [shape = 'u32[]', space=smem, size = 0x4, offset = 0x4, fixed_abs, tag = 'smem constant byte address 0x4 - core index']
  #allocation1 [shape = 'u32[144,128]{1,0:T(1,128)}', space=vmem, size = 0x12000, scoped, tag = 'internal scratch']
  %s0 = inlined_call_operand.hbm [shape: f32[16,128], index: 0, kind: input, shape index: {}]
  %s1 = inlined_call_operand.vmem [shape: f32[1,128], index: 1, kind: input, shape index: {}]
  %s2 = inlined_call_operand.hbm [shape: f32[16,128], index: 2, kind: output, shape index: {}]
  %s3 = sld [smem:[#allocation0]]
  $region22: #{tpu_custom_call.1} parent=0
    _
  %s5 = ssub.s32 1, %s3
  %s6 = scalar_select 0, %s5, %s3
  $region1: #{tpu_custom_call.1} parent=0
    #allocation2 [shape = 'u8[8192]{0}', space=vmem, size = 0x2000, scoped, tag = 'input window, operand 0, single buffered']
    #allocation3 [shape = 's32[1]{0}', space=sflag, size = 0x4, scoped, tag = 'scoped memory for tpu_custom_call.1']
    #allocation4 [shape = 's32[1]{0}', space=sflag, size = 0x4, scoped, tag = 'scoped memory for tpu_custom_call.1']
    #allocation5 [shape = 'u8[8192]{0}', space=vmem, size = 0x2000, scoped, tag = 'output window, operand 0, single buffered']
    %7 = vsyncpa [#allocation3], 0
    %8 = vsyncpa [#allocation4], 0
    // Predicated region
    $region2: #{tpu_custom_call.1} parent=1 // pred_check
      _
    $region3: #{tpu_custom_call.1} parent=1 // pred_check_branch
      %10 = sbr.rel (0) target = $region5
    $region4: #{tpu_custom_call.1} parent=1 // pred_region
      %s12 = ssub.s32 256, 256
      %13 = vsyncadd [#allocation3], %s12
      %s14 = sshll.u32 [#allocation2], 4
      %s15 = int_to_ptr.vmem [resolvable:$true] %s14
      %20 = dma.hbm_to_vmem [thread:$0]  %s0, 256, %s15, [#allocation3], 128, 128, 8
    $region5: #{tpu_custom_call.1} parent=1 // pred_fallthru
      _
    // Predicated region
    $region6: #{tpu_custom_call.1} parent=1 // pred_check
      _
    $region7: #{tpu_custom_call.1} parent=1 // pred_check_branch
      %22 = sbr.rel (0) target = $region9
    $region8: #{tpu_custom_call.1} parent=1 // pred_region
      _
    $region9: #{tpu_custom_call.1} parent=1 // pred_fallthru
      _
    // Predicated region
    $region10: #{tpu_custom_call.1} parent=1 // pred_check
      _
    $region11: #{tpu_custom_call.1} parent=1 // pred_check_branch
      %24 = sbr.rel (0) target = $region13
    $region12: #{tpu_custom_call.1} parent=1 // pred_region
      %25 = dma.done [#allocation3], 256
    $region13: #{tpu_custom_call.1} parent=1 // pred_fallthru
      _
    %v26 = vld [vmem:[#allocation2] sm:$0xff]
    %v27 = vld [vmem:[#allocation2 + $0x8] sm:$0xff]
    %v28 = vld [vmem:[%s1] sm:$0x1]
    %v30 = vlaneseq
    %v31 = vshrl.u32 %v30, 7
    %v32 = vsub.s32 0, %v31
    %v33 = vrot.slane %v28, %v32
    %v35 = vmul.f32 %v26, %v33
    %v36 = vmul.f32 %v27, %v33
    %37 = vst [vmem:[#allocation5] sm:$0xff] %v35
    %38 = vst [vmem:[#allocation5 + $0x8] sm:$0xff] %v36
    // Predicated region
    $region14: #{tpu_custom_call.1} parent=1 // pred_check
      _
    $region15: #{tpu_custom_call.1} parent=1 // pred_check_branch
      %40 = sbr.rel (0) target = $region17
    $region16: #{tpu_custom_call.1} parent=1 // pred_region
      %s42 = ssub.s32 256, 256
      %43 = vsyncadd [#allocation4], %s42
      %s44 = sshll.u32 [#allocation5], 4
      %s45 = int_to_ptr.vmem [resolvable:$true] %s44
      %50 = dma.vmem_to_hbm [thread:$0]  %s45, 256, %s2, [#allocation4], 128, 128, 8
    $region17: #{tpu_custom_call.1} parent=1 // pred_fallthru
      _
    // Predicated region
    $region18: #{tpu_custom_call.1} parent=1 // pred_check
      _
    $region19: #{tpu_custom_call.1} parent=1 // pred_check_branch
      %52 = sbr.rel (0) target = $region21
    $region20: #{tpu_custom_call.1} parent=1 // pred_region
      %53 = dma.done [#allocation4], 256
    $region21: #{tpu_custom_call.1} parent=1 // pred_fallthru
      _
    %54 = vsyncpa [#allocation3], 1
    %55 = vsyncpa [#allocation4], 1

</llo_original>
